<compile_context>
chip_gen: v7x
topology: tpu7x:2x2x1
jax: 0.10.0
libtpu: 0.0.40
codegen_flags: <defaults>
</compile_context>

<pallas_src>
import functools

import jax
import jax.numpy as jnp
from jax.experimental import pallas as pl
from jax.experimental.pallas import tpu as pltpu

NUM_GROUPS = 16
EPS = 1e-5


def _round_up(x, m):
    return (x + m - 1) // m * m


def _vmem_limit_bytes():
    """Per-generation VMEM limit with headroom (v7x: 48 MiB, v5e/v6e: 96 MiB)."""
    try:
        cap = int(pltpu.get_tpu_info().vmem_capacity_bytes)
    except Exception:
        cap = 64 * 1024 * 1024  # conservative fallback (v7x per-TC VMEM)
    return min(cap * 3 // 4, 96 * 1024 * 1024)


# --------------- single-pass kernel: whole group (row) in VMEM ---------------

def _group_norm_row_kernel(x_ref, o_ref):
    d = x_ref.shape[-1]
    xf = x_ref[...].astype(jnp.float32)
    mean = jnp.sum(xf, axis=-1, keepdims=True) * (1.0 / d)
    xc = xf - mean
    # true two-pass variance: tile already resident, no extra HBM traffic,
    # avoids catastrophic cancellation of E[x^2] - mean^2.
    var = jnp.sum(xc * xc, axis=-1, keepdims=True) * (1.0 / d)
    o_ref[...] = (xc * jax.lax.rsqrt(var + EPS)).astype(o_ref.dtype)


# --------------- two-pass D-split kernels (very large groups) ----------------

def _stats_kernel(x_ref, mean_ref, inv_ref, sum_acc, sq_acc,
                  *, d_total, d_chunk, needs_mask):
    d_idx = pl.program_id(1)

    @pl.when(d_idx == 0)
    def _():
        sum_acc[...] = jnp.zeros_like(sum_acc)
        sq_acc[...] = jnp.zeros_like(sq_acc)

    xf = x_ref[...].astype(jnp.float32)
    if needs_mask:
        # mask lanes beyond the true group width (ragged last D chunk).
        lane = jax.lax.broadcasted_iota(jnp.int32, xf.shape, 1) + d_idx * d_chunk
        xf = jnp.where(lane < d_total, xf, 0.0)
    sum_acc[...] += jnp.sum(xf, axis=-1, keepdims=True)
    sq_acc[...] += jnp.sum(xf * xf, axis=-1, keepdims=True)

    @pl.when(d_idx == pl.num_programs(1) - 1)
    def _():
        mean = sum_acc[...] * (1.0 / d_total)
        var = jnp.maximum(sq_acc[...] * (1.0 / d_total) - mean * mean, 0.0)
        mean_ref[...] = mean
        inv_ref[...] = jax.lax.rsqrt(var + EPS)


def _apply_kernel(x_ref, mean_ref, inv_ref, o_ref):
    xf = x_ref[...].astype(jnp.float32)
    # out-of-bounds lanes/rows of the edge blocks are dropped on writeback.
    o_ref[...] = ((xf - mean_ref[...]) * inv_ref[...]).astype(o_ref.dtype)


# ------------------------------- wrappers ------------------------------------

def _choose_block_rows(rows, sub, budget_rows, target_steps=4):
    """Block rows: multiple of `sub`, fits budget, prefers dividing `rows`
    exactly (no ragged blocks) and >= target_steps grid steps (2 per v7x TC)."""
    budget_rows = max(sub, budget_rows // sub * sub)
    divs = []
    i = 1
    while i * i <= rows:
        if rows % i == 0:
            for d in (i, rows // i):
                if d % sub == 0 and d <= budget_rows:
                    divs.append(d)
        i += 1
    if divs:
        pref = [d for d in divs if rows // d >= target_steps]
        return max(pref) if pref else max(divs)
    # rows not a multiple of sub: ragged last block (dropped rows are harmless)
    return min(budget_rows, _round_up(max(rows // target_steps, 1), sub))


def _single_pass(x2, rows, D, sub, per_row_bytes, budget, vmem_limit):
    br = _choose_block_rows(rows, sub, budget // per_row_bytes)
    return pl.pallas_call(
        _group_norm_row_kernel,
        out_shape=jax.ShapeDtypeStruct((rows, D), x2.dtype),
        grid_spec=pltpu.PrefetchScalarGridSpec(
            num_scalar_prefetch=0,
            grid=(pl.cdiv(rows, br),),
            in_specs=[pl.BlockSpec((br, D), lambda i: (i, 0))],
            out_specs=pl.BlockSpec((br, D), lambda i: (i, 0)),
        ),
        compiler_params=pltpu.CompilerParams(
            dimension_semantics=("parallel",),
            vmem_limit_bytes=vmem_limit,
        ),
    )(x2)


def _d_split(x2, rows, D, sub, itemsize, budget, vmem_limit):
    br = sub
    d_chunk = max(128, (budget // (br * (4 * itemsize + 8))) // 128 * 128)
    d_chunk = min(d_chunk, _round_up(D, 128))
    grid = (pl.cdiv(rows, br), pl.cdiv(D, d_chunk))
    needs_mask = (D % d_chunk) != 0

    mean, inv = pl.pallas_call(
        functools.partial(_stats_kernel, d_total=D, d_chunk=d_chunk,
                          needs_mask=needs_mask),
        out_shape=(jax.ShapeDtypeStruct((rows, 1), jnp.float32),
                   jax.ShapeDtypeStruct((rows, 1), jnp.float32)),
        grid_spec=pltpu.PrefetchScalarGridSpec(
            num_scalar_prefetch=0,
            grid=grid,
            in_specs=[pl.BlockSpec((br, d_chunk), lambda i, d: (i, d))],
            out_specs=[pl.BlockSpec((br, 1), lambda i, d: (i, 0)),
                       pl.BlockSpec((br, 1), lambda i, d: (i, 0))],
            scratch_shapes=[pltpu.VMEM((br, 1), jnp.float32),
                            pltpu.VMEM((br, 1), jnp.float32)],
        ),
        compiler_params=pltpu.CompilerParams(
            dimension_semantics=("parallel", "arbitrary"),
            vmem_limit_bytes=vmem_limit,
        ),
    )(x2)

    return pl.pallas_call(
        _apply_kernel,
        out_shape=jax.ShapeDtypeStruct((rows, D), x2.dtype),
        grid_spec=pltpu.PrefetchScalarGridSpec(
            num_scalar_prefetch=0,
            grid=grid,
            in_specs=[pl.BlockSpec((br, d_chunk), lambda i, d: (i, d)),
                      pl.BlockSpec((br, 1), lambda i, d: (i, 0)),
                      pl.BlockSpec((br, 1), lambda i, d: (i, 0))],
            out_specs=pl.BlockSpec((br, d_chunk), lambda i, d: (i, d)),
        ),
        compiler_params=pltpu.CompilerParams(
            dimension_semantics=("parallel", "parallel"),
            vmem_limit_bytes=vmem_limit,
        ),
    )(x2, mean, inv)


def group_norm(x, num_groups=NUM_GROUPS, *, working_set_budget_bytes=None):
    """GroupNorm (no affine, eps=1e-5). x: (N, C, H, W), C % num_groups == 0."""
    N, C, H, W = x.shape
    assert C % num_groups == 0, "channels must be divisible by num_groups"
    G = num_groups
    D = (C // G) * H * W
    rows = N * G

    itemsize = jnp.dtype(x.dtype).itemsize
    sub = 8 * max(1, 4 // itemsize)  # sublane multiple: 8 (f32), 16 (bf16), 32 (int8)

    vmem_limit = _vmem_limit_bytes()
    budget = (working_set_budget_bytes if working_set_budget_bytes is not None
              else vmem_limit * 3 // 4)

    # per-row VMEM working set: 2x input block + 2x output block (double-
    # buffered, native dtype) + ~2 f32 temps (x_f32 and x - mean).
    per_row_bytes = D * (4 * itemsize + 8)

    x2 = x.reshape(rows, D)  # contiguous reshape -> free

    if sub * per_row_bytes <= budget:
        out2 = _single_pass(x2, rows, D, sub, per_row_bytes, budget, vmem_limit)
    else:
        out2 = _d_split(x2, rows, D, sub, itemsize, budget, vmem_limit)

    return out2.reshape(N, C, H, W)


# ------------------------------- reference -----------------------------------

def _group_norm_ref(x, num_groups=NUM_GROUPS):
    N, C, H, W = x.shape
    xg = x.reshape(N, num_groups, -1).astype(jnp.float32)
    mean = jnp.mean(xg, axis=-1, keepdims=True)
    var = jnp.mean((xg - mean) ** 2, axis=-1, keepdims=True)
    y = (xg - mean) / jnp.sqrt(var + EPS)
    return y.reshape(N, C, H, W).astype(x.dtype)


if __name__ == "__main__":
    key = jax.random.PRNGKey(0)

    # Test 1: f32, single-pass path (whole group per row, 4 grid steps).
    N, C, H, W = 2, 32, 16, 16
    x = jax.random.normal(key, (N, C, H, W), dtype=jnp.float32)
    y = jax.block_until_ready(group_norm(x))
    y_ref = _group_norm_ref(x)
    assert y.shape == x.shape and y.dtype == x.dtype
    assert jnp.allclose(y, y_ref, atol=1e-4, rtol=1e-4)

    # Test 2: force the D-split two-pass path (D=196 -> two d-chunks, ragged
    # last chunk exercises in-kernel lane masking, no padding anywhere).
    x2 = jax.random.normal(jax.random.PRNGKey(1), (1, 16, 14, 14),
                           dtype=jnp.float32)
    y2 = jax.block_until_ready(group_norm(x2, working_set_budget_bytes=4096))
    y2_ref = _group_norm_ref(x2)
    assert jnp.allclose(y2, y2_ref, atol=1e-4, rtol=1e-4)

    # Test 3: bf16 input (16-row sublane multiple), single-pass path.
    xb = jax.random.normal(jax.random.PRNGKey(2), (N, C, H, W),
                           dtype=jnp.bfloat16)
    yb = jax.block_until_ready(group_norm(xb))
    yb_ref = _group_norm_ref(xb)
    assert yb.dtype == jnp.bfloat16
    assert jnp.allclose(yb.astype(jnp.float32), yb_ref.astype(jnp.float32),
                        atol=2e-2, rtol=2e-2)

    print("KERNEL_OK")
</pallas_src>

<mosaic_0001>
module attributes {stable_mosaic.version = 11 : i64} {
  func.func @_group_norm_row_kernel(%arg0: i32, %arg1: memref<8x512xf32, #tpu.memory_space<vmem>>, %arg2: memref<8x512xf32, #tpu.memory_space<vmem>>) attributes {dimension_semantics = [#tpu.dimension_semantics<parallel>], iteration_bounds = array<i64: 4>, scalar_prefetch = 0 : i64, scratch_operands = 0 : i64, tpu.core_type = #tpu.core_type<tc>, window_params = [{transform_indices = @transform_0, window_bounds = array<i64: 8, 512>}, {transform_indices = @transform_1, window_bounds = array<i64: 8, 512>}]} {
    %c0 = arith.constant 0 : index
    %c0_0 = arith.constant 0 : index
    %0 = vector.load %arg1[%c0, %c0_0] : memref<8x512xf32, #tpu.memory_space<vmem>>, vector<8x512xf32>
    %cst = arith.constant dense<0.000000e+00> : vector<8xf32>
    %1 = vector.multi_reduction <add>, %0, %cst [1] : vector<8x512xf32> to vector<8xf32>
    %2 = vector.shape_cast %1 : vector<8xf32> to vector<8x1xf32>
    %cst_1 = arith.constant 0.001953125 : f32
    %3 = vector.broadcast %cst_1 : f32 to vector<8x1xf32>
    %4 = arith.mulf %2, %3 : vector<8x1xf32>
    %5 = vector.broadcast %4 : vector<8x1xf32> to vector<8x512xf32>
    %6 = arith.subf %0, %5 : vector<8x512xf32>
    %7 = arith.mulf %6, %6 : vector<8x512xf32>
    %cst_2 = arith.constant dense<0.000000e+00> : vector<8xf32>
    %8 = vector.multi_reduction <add>, %7, %cst_2 [1] : vector<8x512xf32> to vector<8xf32>
    %9 = vector.shape_cast %8 : vector<8xf32> to vector<8x1xf32>
    %cst_3 = arith.constant 0.001953125 : f32
    %10 = vector.broadcast %cst_3 : f32 to vector<8x1xf32>
    %11 = arith.mulf %9, %10 : vector<8x1xf32>
    %cst_4 = arith.constant 9.99999974E-6 : f32
    %12 = vector.broadcast %cst_4 : f32 to vector<8x1xf32>
    %13 = arith.addf %11, %12 : vector<8x1xf32>
    %14 = math.rsqrt %13 : vector<8x1xf32>
    %15 = vector.broadcast %14 : vector<8x1xf32> to vector<8x512xf32>
    %16 = arith.mulf %6, %15 : vector<8x512xf32>
    %c0_5 = arith.constant 0 : index
    %c0_6 = arith.constant 0 : index
    %17 = vector.load %arg2[%c0_5, %c0_6] : memref<8x512xf32, #tpu.memory_space<vmem>>, vector<8x512xf32>
    tpu.vector_store %arg2[%c0_5, %c0_6], %16 {strides = array<i32>} : memref<8x512xf32, #tpu.memory_space<vmem>>, vector<8x512xf32>,
    return
  }
  func.func @transform_0(%arg0: i32) -> (i32, i32) {
    %c0_i32 = arith.constant 0 : i32
    %c0_i32_0 = arith.constant 0 : i32
    return %arg0, %c0_i32 : i32, i32
  }
  func.func @transform_1(%arg0: i32) -> (i32, i32) {
    %c0_i32 = arith.constant 0 : i32
    %c0_i32_0 = arith.constant 0 : i32
    return %arg0, %c0_i32 : i32, i32
  }
}

</mosaic_0001>

<llo_original>
// kernel: tpu_custom_call.1
$region0: #{tpu_custom_call.1}
  #allocation0 [shape = 'u32[]', space=smem, size = 0x4, offset = 0x4, fixed_abs, tag = 'smem constant byte address 0x4 - core index']
  #allocation1 [shape = 'u32[144,128]{1,0:T(1,128)}', space=vmem, size = 0x12000, scoped, tag = 'internal scratch']
  %s0 = inlined_call_operand.hbm [shape: f32[32,512], index: 0, kind: input, shape index: {}]
  %s1 = inlined_call_operand.hbm [shape: f32[32,512], index: 1, kind: output, shape index: {}]
  %s2 = sld [smem:[#allocation0]]
  $region41: #{tpu_custom_call.1} parent=0
    _
  %s4 = ssub.s32 1, %s2
  %s5 = scalar_select 0, %s4, %s2
  $region1: #{tpu_custom_call.1} parent=0
    #allocation2 [shape = 'u8[32768]{0}', space=vmem, size = 0x8000, scoped, tag = 'input window, operand 0']
    #allocation3 [shape = 's32[2]{0}', space=sflag, size = 0x8, scoped, tag = 'scoped memory for tpu_custom_call.1']
    #allocation4 [shape = 's32[2]{0}', space=sflag, size = 0x8, scoped, tag = 'scoped memory for tpu_custom_call.1']
    #allocation5 [shape = 'u8[32768]{0}', space=vmem, size = 0x8000, scoped, tag = 'output window, operand 0']
    %6 = vsyncpa [#allocation3], 0
    %s7 = scalar_lea.sflag [#allocation3], 1
    %8 = vsyncpa %s7, 0
    %9 = vsyncpa [#allocation4], 0
    %s10 = scalar_lea.sflag [#allocation4], 1
    %11 = vsyncpa %s10, 0
    loop: start=0, step=1, limit=6
    $region2: #{tpu_custom_call.1} parent=1 // loop_pre_header
      _
    $region3: #{tpu_custom_call.1} parent=1 // loop_header
      %s13 = sphi 0, %s17
      %p14 = scmp.ge.s32.totalorder %s13, 6
      %s23 = sphi 0, %s25
      %s26 = sphi 0, %s23
      %s27 = sphi 0, %s26
      %s43 = sphi 0, %s27
      %s49 = sphi 0, %s51
      %s52 = sphi 0, %s49
      %s53 = sphi 0, %s52
      %s69 = sphi 0, %s53
    $region4: #{tpu_custom_call.1} parent=1 // loop_header_branch
      %16 = sbr.rel (%p14) target = $region8
    $region5: #{tpu_custom_call.1} parent=1 // loop_body
      %s18 = ssub.s32 %s13, 1
      %s19 = ssub.s32 %s13, 2
      %s20 = sadd.s32 %s13, 1
      %s21 = ssub.s32 %s13, %s20
      %p22 = scmp.eq.s32.totalorder %s21, 0
      %s24 = sadd.s32 %s23, 1
      %s25 = scalar_select %p22, %s23, %s24
      %p28 = pneg %p22
      %p29 = scmp.eq.s32.totalorder %s13, 3
      %p30 = por %p28, %p29
      %p31 = scmp.ne.s32.totalorder %s23, %s26
      %p32 = scmp.eq.s32.totalorder %s13, 0
      %p33 = por %p31, %p32
      %p34 = scmp.ne.s32.totalorder %s23, %s26
      %p35 = scmp.eq.s32.totalorder %s18, 3
      %p36 = por %p34, %p35
      %p37 = scmp.ne.s32.totalorder %s26, %s27
      %p38 = scmp.eq.s32.totalorder %s18, 0
      %p39 = por %p37, %p38
      %p40 = scmp.ne.s32.totalorder %s26, %s27
      %p41 = scmp.eq.s32.totalorder %s19, 3
      %p42 = por %p40, %p41
      %p44 = scmp.ne.s32.totalorder %s27, %s43
      %p45 = scmp.eq.s32.totalorder %s19, 0
      %p46 = por %p44, %p45
      %s47 = ssub.s32 %s13, %s20
      %p48 = scmp.eq.s32.totalorder %s47, 0
      %s50 = sadd.s32 %s49, 1
      %s51 = scalar_select %p48, %s49, %s50
      %p54 = pneg %p48
      %p55 = scmp.eq.s32.totalorder %s13, 3
      %p56 = por %p54, %p55
      %p57 = scmp.ne.s32.totalorder %s49, %s52
      %p58 = scmp.eq.s32.totalorder %s13, 0
      %p59 = por %p57, %p58
      %p60 = scmp.ne.s32.totalorder %s49, %s52
      %p61 = scmp.eq.s32.totalorder %s18, 3
      %p62 = por %p60, %p61
      %p63 = scmp.ne.s32.totalorder %s52, %s53
      %p64 = scmp.eq.s32.totalorder %s18, 0
      %p65 = por %p63, %p64
      %p66 = scmp.ne.s32.totalorder %s52, %s53
      %p67 = scmp.eq.s32.totalorder %s19, 3
      %p68 = por %p66, %p67
      %p70 = scmp.ne.s32.totalorder %s53, %s69
      %p71 = scmp.eq.s32.totalorder %s19, 0
      %p72 = por %p70, %p71
      %p73 = scmp.le.s32.totalorder 1, %s13
      %p74 = scmp.lt.s32.totalorder %s13, 5
      %p75 = pnand %p73, %p74
      %p76 = pneg %p75
      // Predicated region
      $region9: #{tpu_custom_call.1} parent=5 // pred_check
        _
      $region10: #{tpu_custom_call.1} parent=5 // pred_check_branch
        %78 = sbr.rel (%p75) target = $region12
      $region11: #{tpu_custom_call.1} parent=5 // pred_region
        %s79 = ssub.s32 %s13, 1
      $region12: #{tpu_custom_call.1} parent=5 // pred_fallthru
        _
      %p80 = scmp.lt.s32.totalorder %s13, 4
      // Predicated region
      $region13: #{tpu_custom_call.1} parent=5 // pred_check
        %p81 = pneg %p80
      $region14: #{tpu_custom_call.1} parent=5 // pred_check_branch
        %83 = sbr.rel (%p81) target = $region16
      $region15: #{tpu_custom_call.1} parent=5 // pred_region
        // Predicated region
        $region17: #{tpu_custom_call.1} parent=15 // pred_check
          %p84 = pneg %p33
        $region18: #{tpu_custom_call.1} parent=15 // pred_check_branch
          %86 = sbr.rel (%p84) target = $region20
        $region19: #{tpu_custom_call.1} parent=15 // pred_region
          %s87 = sand.u32 %s23, 1
          %s88 = scalar_lea.sflag [#allocation3], %s87
          %s89 = sand.u32 %s23, 1
          %s90 = smul.addr %s89, 32
          %s91 = scalar_lea.vmem [#allocation2], %s90
          %s93 = ssub.s32 512, 512
          %94 = vsyncadd %s88, %s93
          %s95 = smul.addr %s13, 4
          %s96 = smul.addr %s95, 128
          %s97 = scalar_lea.hbm %s0, %s96
          %s99 = sshll.u32 %s91, 4
          %s100 = int_to_ptr.vmem [resolvable:$true] %s99
          %102 = dma.hbm_to_vmem [thread:$0]  %s97, 512, %s100, %s88
        $region20: #{tpu_custom_call.1} parent=15 // pred_fallthru
          _
      $region16: #{tpu_custom_call.1} parent=5 // pred_fallthru
        _
      %p103 = scmp.le.s32.totalorder 1, %s13
      %p104 = scmp.lt.s32.totalorder %s13, 5
      %p105 = pnand %p103, %p104
      %p106 = pneg %p105
      // Predicated region
      $region21: #{tpu_custom_call.1} parent=5 // pred_check
        _
      $region22: #{tpu_custom_call.1} parent=5 // pred_check_branch
        %108 = sbr.rel (%p105) target = $region24
      $region23: #{tpu_custom_call.1} parent=5 // pred_region
        %s109 = ssub.s32 %s13, 1
        %s110 = sand.u32 %s26, 1
        %s111 = scalar_lea.sflag [#allocation3], %s110
        %s112 = sand.u32 %s26, 1
        %s113 = smul.addr %s112, 32
        %s114 = scalar_lea.vmem [#allocation2], %s113
        // Predicated region
        $region25: #{tpu_custom_call.1} parent=23 // pred_check
          %p115 = pneg %p39
        $region26: #{tpu_custom_call.1} parent=23 // pred_check_branch
          %117 = sbr.rel (%p115) target = $region28
        $region27: #{tpu_custom_call.1} parent=23 // pred_region
          %118 = dma.done %s111, 512
        $region28: #{tpu_custom_call.1} parent=23 // pred_fallthru
          _
        %s119 = sand.u32 %s26, 1
        %s120 = scalar_lea.sflag [#allocation3], %s119
        %s121 = sand.u32 %s26, 1
        %s122 = smul.addr %s121, 32
        %s123 = scalar_lea.vmem [#allocation2], %s122
        %p124 = pneg %p39
        %p125 = pneg %p36
        %p126 = pneg %p65
        %p127 = pneg %p62
        %s128 = sand.u32 %s52, 1
        %s129 = scalar_lea.sflag [#allocation4], %s128
        %s130 = sand.u32 %s52, 1
        %s131 = smul.addr %s130, 32
        %s132 = scalar_lea.vmem [#allocation5], %s131
        %v133 = vld [vmem:[%s114] sm:$0xff]
        %v134 = vld [vmem:[%s114 + $0x8] sm:$0xff]
        %v135 = vld [vmem:[%s114 + $0x10] sm:$0xff]
        %v136 = vld [vmem:[%s114 + $0x18] sm:$0xff]
        %v137 = vadd.f32 %v133, %v134
        %v138 = vadd.f32 %v137, %v135
        %v139 = vadd.f32 %v138, %v136
        %140 = vadd.xlane.f32.xlu0 %v139
        %v141 = vpop.xlane.xlu0 %140
        %v142 = vmul.f32 %v141, 0.001953125
        %v143 = vsub.f32 %v133, %v142
        %v144 = vsub.f32 %v134, %v142
        %v145 = vsub.f32 %v135, %v142
        %v146 = vsub.f32 %v136, %v142
        %v147 = vmul.f32 %v143, %v143
        %v148 = vmul.f32 %v144, %v144
        %v149 = vmul.f32 %v145, %v145
        %v150 = vmul.f32 %v146, %v146
        %v151 = vadd.f32 %v147, %v148
        %v152 = vadd.f32 %v151, %v149
        %v153 = vadd.f32 %v152, %v150
        %154 = vadd.xlane.f32.xlu0 %v153
        %v155 = vpop.xlane.xlu0 %154
        %v156 = vmul.f32 %v155, 0.001953125
        %v157 = vadd.f32 %v156, 1e-05
        %v158 = vrsqrt.pop %v157
        %v159 = vmul.f32 %v143, %v158
        %v160 = vmul.f32 %v144, %v158
        %v161 = vmul.f32 %v145, %v158
        %v162 = vmul.f32 %v146, %v158
        %163 = vst [vmem:[%s132] sm:$0xff] %v159
        %164 = vst [vmem:[%s132 + $0x8] sm:$0xff] %v160
        %165 = vst [vmem:[%s132 + $0x10] sm:$0xff] %v161
        %166 = vst [vmem:[%s132 + $0x18] sm:$0xff] %v162
        %s167 = sand.u32 %s52, 1
        %s168 = scalar_lea.sflag [#allocation4], %s167
        %s169 = sand.u32 %s52, 1
        %s170 = smul.addr %s169, 32
        %s171 = scalar_lea.vmem [#allocation5], %s170
        // Predicated region
        $region29: #{tpu_custom_call.1} parent=23 // pred_check
          %p172 = pneg %p62
        $region30: #{tpu_custom_call.1} parent=23 // pred_check_branch
          %174 = sbr.rel (%p172) target = $region32
        $region31: #{tpu_custom_call.1} parent=23 // pred_region
          %s176 = ssub.s32 512, 512
          %177 = vsyncadd %s168, %s176
          %s178 = smul.addr %s18, 4
          %s179 = smul.addr %s178, 128
          %s180 = scalar_lea.hbm %s1, %s179
          %s182 = sshll.u32 %s171, 4
          %s183 = int_to_ptr.vmem [resolvable:$true] %s182
          %185 = dma.vmem_to_hbm [thread:$0]  %s183, 512, %s180, %s168
        $region32: #{tpu_custom_call.1} parent=23 // pred_fallthru
          _
      $region24: #{tpu_custom_call.1} parent=5 // pred_fallthru
        _
      %p186 = scmp.le.s32.totalorder 2, %s13
      // Predicated region
      $region33: #{tpu_custom_call.1} parent=5 // pred_check
        %p187 = pneg %p186
      $region34: #{tpu_custom_call.1} parent=5 // pred_check_branch
        %189 = sbr.rel (%p187) target = $region36
      $region35: #{tpu_custom_call.1} parent=5 // pred_region
        %s190 = ssub.s32 %s13, 2
        // Predicated region
        $region37: #{tpu_custom_call.1} parent=35 // pred_check
          %p191 = pneg %p68
        $region38: #{tpu_custom_call.1} parent=35 // pred_check_branch
          %193 = sbr.rel (%p191) target = $region40
        $region39: #{tpu_custom_call.1} parent=35 // pred_region
          %s194 = sand.u32 %s53, 1
          %s195 = scalar_lea.sflag [#allocation4], %s194
          %s196 = sand.u32 %s53, 1
          %s197 = smul.addr %s196, 32
          %s198 = scalar_lea.vmem [#allocation5], %s197
          %199 = dma.done %s195, 512
        $region40: #{tpu_custom_call.1} parent=35 // pred_fallthru
          _
      $region36: #{tpu_custom_call.1} parent=5 // pred_fallthru
        _
    $region6: #{tpu_custom_call.1} parent=1 // loop_footer
      %s17 = sadd.s32 1, %s13
    $region7: #{tpu_custom_call.1} parent=1 // loop_footer_branch
      %12 = sbr.rel target = $region3
    $region8: #{tpu_custom_call.1} parent=1 // loop_exit
      _
    %200 = vsyncpa [#allocation3], 1
    %s201 = scalar_lea.sflag [#allocation3], 1
    %202 = vsyncpa %s201, 1
    %203 = vsyncpa [#allocation4], 1
    %s204 = scalar_lea.sflag [#allocation4], 1
    %205 = vsyncpa %s204, 1

</llo_original>
